<compile_context>
chip_gen: v7x
topology: tpu7x:2x2x1
jax: 0.10.0
libtpu: 0.0.40
codegen_flags: <defaults>
</compile_context>

<pallas_src>
import functools

import jax
import jax.numpy as jnp
from jax import lax
from jax.experimental import pallas as pl
from jax.experimental.pallas import tpu as pltpu

LANE = 128      # TPU lane width
TM_MAX = 2048   # rows per block: 2048 * 128 * 4 B = 1 MiB per f32 input block


def _sublane_align(dtype):
    """Native sublane tiling multiple for a dtype (8 for 4B, 16 for 2B, 32 for 1B)."""
    itemsize = jnp.dtype(dtype).itemsize
    return 8 * max(1, 4 // itemsize)


def _mse_sumsq_kernel(x_ref, y_ref, o_ref, *, rows, tm, tiles_per_chunk, need_mask):
    c = pl.program_id(0)   # parallel chunk axis (megacore)
    t = pl.program_id(1)   # sequential reduction axis within the chunk

    @pl.when(t == 0)
    def _():
        o_ref[...] = jnp.zeros_like(o_ref)

    # Cast to f32 inside the kernel (free for f32 inputs, cheap VPU op for bf16).
    d = x_ref[...].astype(jnp.float32) - y_ref[...].astype(jnp.float32)

    if need_mask:
        # Mask rows beyond the true extent (partial last block and/or redundant
        # clamped steps of the parallel split contribute 0).
        tile = c * tiles_per_chunk + t
        row_ids = tile * tm + lax.broadcasted_iota(jnp.int32, (tm, LANE), 0)
        d = jnp.where(row_ids < rows, d, 0.0)

    sq = d * d
    # Accumulate into a vreg-shaped (8,128) partial-sum tile: reduces only over
    # whole-vreg groups (pure VALU adds). The final cross-lane reduce is done
    # once in the wrapper.
    o_ref[...] += jnp.sum(sq.reshape(tm // 8, 8, LANE), axis=0)


def mse_loss(recon_imgs, imgs, label_maps=None, mappings=None):
    """Global mean-squared-error between recon_imgs and imgs (extra args ignored)."""
    assert recon_imgs.shape == imgs.shape
    n = recon_imgs.size

    x = recon_imgs.reshape(-1)
    y = imgs.reshape(-1)

    # Bulk rows aligned to the dtype's native sublane tiling (keeps every
    # BlockSpec legal for f32 / bf16 / int8 without a padded HBM copy).
    align = max(_sublane_align(recon_imgs.dtype), _sublane_align(imgs.dtype))
    rows = (n // (align * LANE)) * align
    n_bulk = rows * LANE

    # Tail (< align*128 elements): handled in plain JAX — negligible work.
    rem_sumsq = jnp.float32(0.0)
    if n_bulk < n:
        dr = x[n_bulk:].astype(jnp.float32) - y[n_bulk:].astype(jnp.float32)
        rem_sumsq = jnp.sum(dr * dr)

    if rows == 0:
        return rem_sumsq / jnp.float32(n)

    xb = x[:n_bulk].reshape(rows, LANE)
    yb = y[:n_bulk].reshape(rows, LANE)

    # Block rows: as large as useful; rows (and hence tm) is a multiple of `align`.
    tm = min(TM_MAX, rows)
    total_tiles = pl.cdiv(rows, tm)

    # Outer parallel axis: lets both TensorCores of a v7x chip stream HBM.
    n_chunks = 2 if total_tiles >= 2 else 1
    tiles_per_chunk = pl.cdiv(total_tiles, n_chunks)
    need_mask = (rows % tm != 0) or (n_chunks * tiles_per_chunk != total_tiles)

    def in_map(c, t):
        # Clamp so redundant steps of the parallel split re-read a valid block
        # (their contribution is zeroed by the in-kernel mask).
        tile = jnp.minimum(c * tiles_per_chunk + t, total_tiles - 1)
        return (tile, 0)

    kernel = functools.partial(
        _mse_sumsq_kernel,
        rows=rows, tm=tm, tiles_per_chunk=tiles_per_chunk, need_mask=need_mask)

    partials = pl.pallas_call(
        kernel,
        out_shape=jax.ShapeDtypeStruct((n_chunks, 8, LANE), jnp.float32),
        grid_spec=pltpu.PrefetchScalarGridSpec(
            num_scalar_prefetch=0,
            grid=(n_chunks, tiles_per_chunk),
            in_specs=[
                pl.BlockSpec((tm, LANE), in_map),
                pl.BlockSpec((tm, LANE), in_map),
            ],
            out_specs=pl.BlockSpec((None, 8, LANE), lambda c, t: (c, 0, 0)),
        ),
        compiler_params=pltpu.CompilerParams(
            dimension_semantics=("parallel", "arbitrary")),
    )(xb, yb)

    total = jnp.sum(partials) + rem_sumsq
    return total / jnp.float32(n)


if __name__ == "__main__":
    key = jax.random.PRNGKey(0)
    k1, k2, k3 = jax.random.split(key, 3)

    # Small "batch of 3D images": (batch=2, channels=1, D=4, H=16, W=16)
    shape = (2, 1, 4, 16, 16)
    recon_imgs = jax.random.normal(k1, shape, dtype=jnp.float32)
    imgs = jax.random.normal(k2, shape, dtype=jnp.float32)
    # Unused by the loss (kept for interface parity with the PyTorch module).
    label_maps = jax.random.randint(k3, (2, 4, 16, 16), 0, 3)
    mappings = jnp.arange(4, dtype=jnp.int32)

    loss = mse_loss(recon_imgs, imgs, label_maps, mappings)
    loss = jax.block_until_ready(loss)

    # Reference check in plain JAX.
    ref = jnp.mean((recon_imgs - imgs) ** 2)
    assert jnp.allclose(loss, ref, rtol=1e-6, atol=1e-6), (loss, ref)

    print("KERNEL_OK")
</pallas_src>

<mosaic_0001>
module attributes {stable_mosaic.version = 11 : i64} {
  func.func @_mse_sumsq_kernel(%arg0: i32, %arg1: i32, %arg2: memref<16x128xf32, #tpu.memory_space<vmem>>, %arg3: memref<16x128xf32, #tpu.memory_space<vmem>>, %arg4: memref<1x8x128xf32, #tpu.memory_space<vmem>>) attributes {dimension_semantics = [#tpu.dimension_semantics<parallel>, #tpu.dimension_semantics<arbitrary>], iteration_bounds = array<i64: 1, 1>, scalar_prefetch = 0 : i64, scratch_operands = 0 : i64, tpu.core_type = #tpu.core_type<tc>, window_params = [{transform_indices = @transform_0, window_bounds = array<i64: 16, 128>}, {transform_indices = @transform_1, window_bounds = array<i64: 16, 128>}, {transform_indices = @transform_2, window_bounds = array<i64: 1, 8, 128>}]} {
    %c0_i32 = arith.constant 0 : i32
    %0 = arith.cmpi eq, %arg1, %c0_i32 : i32
    %1 = arith.extui %0 : i1 to i32
    %c0_i32_0 = arith.constant 0 : i32
    %2 = arith.cmpi ne, %1, %c0_i32_0 : i32
    scf.if %2 {
      %cst_10 = arith.constant 0.000000e+00 : f32
      %15 = vector.broadcast %cst_10 : f32 to vector<8x128xf32>
      %c0_11 = arith.constant 0 : index
      %c0_12 = arith.constant 0 : index
      %c0_13 = arith.constant 0 : index
      %16 = vector.load %arg4[%c0_11, %c0_12, %c0_13] : memref<1x8x128xf32, #tpu.memory_space<vmem>>, vector<1x8x128xf32>
      %17 = vector.shape_cast %16 : vector<1x8x128xf32> to vector<8x128xf32>
      %18 = vector.shape_cast %15 : vector<8x128xf32> to vector<1x8x128xf32>
      tpu.vector_store %arg4[%c0_11, %c0_12, %c0_13], %18 {strides = array<i32>} : memref<1x8x128xf32, #tpu.memory_space<vmem>>, vector<1x8x128xf32>,
    } else {
    }
    %c0 = arith.constant 0 : index
    %c0_1 = arith.constant 0 : index
    %3 = vector.load %arg2[%c0, %c0_1] : memref<16x128xf32, #tpu.memory_space<vmem>>, vector<16x128xf32>
    %c0_2 = arith.constant 0 : index
    %c0_3 = arith.constant 0 : index
    %4 = vector.load %arg3[%c0_2, %c0_3] : memref<16x128xf32, #tpu.memory_space<vmem>>, vector<16x128xf32>
    %5 = arith.subf %3, %4 : vector<16x128xf32>
    %6 = arith.mulf %5, %5 : vector<16x128xf32>
    %c0_4 = arith.constant 0 : index
    %c0_5 = arith.constant 0 : index
    %c0_6 = arith.constant 0 : index
    %7 = vector.load %arg4[%c0_4, %c0_5, %c0_6] : memref<1x8x128xf32, #tpu.memory_space<vmem>>, vector<1x8x128xf32>
    %8 = vector.shape_cast %7 : vector<1x8x128xf32> to vector<8x128xf32>
    %9 = vector.shape_cast %6 : vector<16x128xf32> to vector<2x8x128xf32>
    %cst = arith.constant dense<0.000000e+00> : vector<8x128xf32>
    %10 = vector.multi_reduction <add>, %9, %cst [0] : vector<2x8x128xf32> to vector<8x128xf32>
    %11 = arith.addf %8, %10 : vector<8x128xf32>
    %c0_7 = arith.constant 0 : index
    %c0_8 = arith.constant 0 : index
    %c0_9 = arith.constant 0 : index
    %12 = vector.load %arg4[%c0_7, %c0_8, %c0_9] : memref<1x8x128xf32, #tpu.memory_space<vmem>>, vector<1x8x128xf32>
    %13 = vector.shape_cast %12 : vector<1x8x128xf32> to vector<8x128xf32>
    %14 = vector.shape_cast %11 : vector<8x128xf32> to vector<1x8x128xf32>
    tpu.vector_store %arg4[%c0_7, %c0_8, %c0_9], %14 {strides = array<i32>} : memref<1x8x128xf32, #tpu.memory_space<vmem>>, vector<1x8x128xf32>,
    return
  }
  func.func @transform_0(%arg0: i32, %arg1: i32) -> (i32, i32) {
    %c1_i32 = arith.constant 1 : i32
    %0 = arith.muli %arg0, %c1_i32 : i32
    %1 = arith.addi %0, %arg1 : i32
    %c0_i32 = arith.constant 0 : i32
    %2 = arith.minsi %1, %c0_i32 : i32
    %c0_i32_0 = arith.constant 0 : i32
    %c0_i32_1 = arith.constant 0 : i32
    return %2, %c0_i32_0 : i32, i32
  }
  func.func @transform_1(%arg0: i32, %arg1: i32) -> (i32, i32) {
    %c1_i32 = arith.constant 1 : i32
    %0 = arith.muli %arg0, %c1_i32 : i32
    %1 = arith.addi %0, %arg1 : i32
    %c0_i32 = arith.constant 0 : i32
    %2 = arith.minsi %1, %c0_i32 : i32
    %c0_i32_0 = arith.constant 0 : i32
    %c0_i32_1 = arith.constant 0 : i32
    return %2, %c0_i32_0 : i32, i32
  }
  func.func @transform_2(%arg0: i32, %arg1: i32) -> (i32, i32, i32) {
    %c0_i32 = arith.constant 0 : i32
    %c0_i32_0 = arith.constant 0 : i32
    %c0_i32_1 = arith.constant 0 : i32
    return %arg0, %c0_i32, %c0_i32_0 : i32, i32, i32
  }
}

</mosaic_0001>

<llo_original>
// kernel: tpu_custom_call.1
$region0: #{tpu_custom_call.1}
  #allocation0 [shape = 'u32[]', space=smem, size = 0x4, offset = 0x4, fixed_abs, tag = 'smem constant byte address 0x4 - core index']
  #allocation1 [shape = 'u32[144,128]{1,0:T(1,128)}', space=vmem, size = 0x12000, scoped, tag = 'internal scratch']
  %s0 = inlined_call_operand.hbm [shape: f32[16,128], index: 0, kind: input, shape index: {}]
  %s1 = inlined_call_operand.hbm [shape: f32[16,128], index: 1, kind: input, shape index: {}]
  %s2 = inlined_call_operand.hbm [shape: f32[1,8,128], index: 2, kind: output, shape index: {}]
  %s3 = sld [smem:[#allocation0]]
  $region30: #{tpu_custom_call.1} parent=0
    _
  %s5 = ssub.s32 1, %s3
  %s6 = scalar_select 0, %s5, %s3
  $region1: #{tpu_custom_call.1} parent=0
    #allocation2 [shape = 'u8[8192]{0}', space=vmem, size = 0x2000, scoped, tag = 'input window, operand 0, single buffered']
    #allocation3 [shape = 's32[1]{0}', space=sflag, size = 0x4, scoped, tag = 'scoped memory for tpu_custom_call.1']
    #allocation4 [shape = 's32[1]{0}', space=sflag, size = 0x4, scoped, tag = 'scoped memory for tpu_custom_call.1']
    #allocation5 [shape = 'u8[8192]{0}', space=vmem, size = 0x2000, scoped, tag = 'input window, operand 1, single buffered']
    #allocation6 [shape = 's32[1]{0}', space=sflag, size = 0x4, scoped, tag = 'scoped memory for tpu_custom_call.1']
    #allocation7 [shape = 'u8[4096]{0}', space=vmem, size = 0x1000, scoped, tag = 'output window, operand 0, single buffered']
    %7 = vsyncpa [#allocation3], 0
    %8 = vsyncpa [#allocation6], 0
    %9 = vsyncpa [#allocation4], 0
    // Predicated region
    $region2: #{tpu_custom_call.1} parent=1 // pred_check
      _
    $region3: #{tpu_custom_call.1} parent=1 // pred_check_branch
      %11 = sbr.rel (0) target = $region5
    $region4: #{tpu_custom_call.1} parent=1 // pred_region
      %s12 = sadd.s32 0, 0
      %p13 = scmp.lt.s32.totalorder %s12, 0
      %s14 = scalar_select %p13, %s12, 0
      %s15 = smul.u32 2, %s14
      %s17 = ssub.s32 256, 256
      %18 = vsyncadd [#allocation3], %s17
      %s19 = smul.addr %s15, 128
      %s20 = scalar_lea.hbm %s0, %s19
      %s21 = sshll.u32 [#allocation2], 4
      %s22 = int_to_ptr.vmem [resolvable:$true] %s21
      %27 = dma.hbm_to_vmem [thread:$0]  %s20, 256, %s22, [#allocation3], 128, 128, 8
    $region5: #{tpu_custom_call.1} parent=1 // pred_fallthru
      _
    // Predicated region
    $region6: #{tpu_custom_call.1} parent=1 // pred_check
      _
    $region7: #{tpu_custom_call.1} parent=1 // pred_check_branch
      %29 = sbr.rel (0) target = $region9
    $region8: #{tpu_custom_call.1} parent=1 // pred_region
      %s30 = sadd.s32 0, 0
      %p31 = scmp.lt.s32.totalorder %s30, 0
      %s32 = scalar_select %p31, %s30, 0
      %s33 = smul.u32 2, %s32
      %s35 = ssub.s32 256, 256
      %36 = vsyncadd [#allocation6], %s35
      %s37 = smul.addr %s33, 128
      %s38 = scalar_lea.hbm %s1, %s37
      %s39 = sshll.u32 [#allocation5], 4
      %s40 = int_to_ptr.vmem [resolvable:$true] %s39
      %45 = dma.hbm_to_vmem [thread:$0]  %s38, 256, %s40, [#allocation6], 128, 128, 8
    $region9: #{tpu_custom_call.1} parent=1 // pred_fallthru
      _
    // Predicated region
    $region10: #{tpu_custom_call.1} parent=1 // pred_check
      _
    $region11: #{tpu_custom_call.1} parent=1 // pred_check_branch
      %47 = sbr.rel (0) target = $region13
    $region12: #{tpu_custom_call.1} parent=1 // pred_region
      %48 = dma.done [#allocation3], 256
    $region13: #{tpu_custom_call.1} parent=1 // pred_fallthru
      _
    // Predicated region
    $region14: #{tpu_custom_call.1} parent=1 // pred_check
      _
    $region15: #{tpu_custom_call.1} parent=1 // pred_check_branch
      %50 = sbr.rel (0) target = $region17
    $region16: #{tpu_custom_call.1} parent=1 // pred_region
      %51 = dma.done [#allocation6], 256
    $region17: #{tpu_custom_call.1} parent=1 // pred_fallthru
      _
    %s52 = sadd.s32 0, 0
    %p53 = scmp.lt.s32.totalorder %s52, 0
    %s54 = scalar_select %p53, %s52, 0
    %s55 = smul.u32 2, %s54
    %s56 = sadd.s32 0, 0
    %p57 = scmp.lt.s32.totalorder %s56, 0
    %s58 = scalar_select %p57, %s56, 0
    %s59 = smul.u32 2, %s58
    %p60 = scmp.eq.s32.totalorder 0, 0
    // Predicated region
    $region18: #{tpu_custom_call.1} parent=1 // pred_check
      %p61 = pneg %p60
    $region19: #{tpu_custom_call.1} parent=1 // pred_check_branch
      %63 = sbr.rel (%p61) target = $region21
    $region20: #{tpu_custom_call.1} parent=1 // pred_region
      %64 = vst [vmem:[#allocation7] sm:$0xff] 0.0
    $region21: #{tpu_custom_call.1} parent=1 // pred_fallthru
      _
    %v65 = vld [vmem:[#allocation2] sm:$0xff]
    %v66 = vld [vmem:[#allocation2 + $0x8] sm:$0xff]
    %v67 = vld [vmem:[#allocation5] sm:$0xff]
    %v68 = vld [vmem:[#allocation5 + $0x8] sm:$0xff]
    %v69 = vsub.f32 %v65, %v67
    %v70 = vsub.f32 %v66, %v68
    %v71 = vmul.f32 %v69, %v69
    %v72 = vmul.f32 %v70, %v70
    %v73 = vld [vmem:[#allocation7] sm:$0xff]
    %v74 = vadd.f32 %v71, %v72
    %v75 = vadd.f32 %v73, %v74
    %76 = vst [vmem:[#allocation7] sm:$0xff] %v75
    // Predicated region
    $region22: #{tpu_custom_call.1} parent=1 // pred_check
      _
    $region23: #{tpu_custom_call.1} parent=1 // pred_check_branch
      %78 = sbr.rel (0) target = $region25
    $region24: #{tpu_custom_call.1} parent=1 // pred_region
      %s80 = ssub.s32 128, 128
      %81 = vsyncadd [#allocation4], %s80
      %s83 = sshll.u32 [#allocation7], 4
      %s84 = int_to_ptr.vmem [resolvable:$true] %s83
      %86 = dma.vmem_to_hbm [thread:$0]  %s84, 128, %s2, [#allocation4]
    $region25: #{tpu_custom_call.1} parent=1 // pred_fallthru
      _
    // Predicated region
    $region26: #{tpu_custom_call.1} parent=1 // pred_check
      _
    $region27: #{tpu_custom_call.1} parent=1 // pred_check_branch
      %88 = sbr.rel (0) target = $region29
    $region28: #{tpu_custom_call.1} parent=1 // pred_region
      %89 = dma.done [#allocation4], 128
    $region29: #{tpu_custom_call.1} parent=1 // pred_fallthru
      _
    %90 = vsyncpa [#allocation3], 1
    %91 = vsyncpa [#allocation6], 1
    %92 = vsyncpa [#allocation4], 1

</llo_original>
